<compile_context>
chip_gen: v7x
topology: tpu7x:2x2x1
jax: 0.10.0
libtpu: 0.0.40
codegen_flags: <defaults>
</compile_context>

<pallas_src>
import functools

import jax
import jax.numpy as jnp
from jax.experimental import pallas as pl
from jax.experimental.pallas import tpu as pltpu


# Scoped-VMEM request shared by all pallas_calls: below v7x's 64 MiB physical
# VMEM (leaves headroom), far above the worst-case double-buffered footprint
# of the default tiles, and fine on v5e/v6e (128 MiB physical).
_VMEM_LIMIT_BYTES = 48 * 1024 * 1024


def _pick_tile(dim: int, preferred: int, granule: int) -> int:
    """Largest multiple of `granule` <= `preferred` that evenly divides `dim`.

    Falls back to the full dimension, which always satisfies the TPU (8, 128)
    block-shape constraint (full dims are allowed verbatim)."""
    if dim <= preferred:
        return dim
    cand = (preferred // granule) * granule
    while cand >= granule:
        if dim % cand == 0:
            return cand
        cand -= granule
    return dim


# ----------------------------------------------------------------------------
# Kernel 1: generic tiled linear  y = x @ W^T + b   (used for W_o)
# ----------------------------------------------------------------------------
def _linear_kernel(x_ref, wt_ref, b_ref, o_ref, acc_ref):
    kk = pl.program_id(2)

    @pl.when(kk == 0)
    def _init():
        acc_ref[...] = jnp.zeros_like(acc_ref)

    acc_ref[...] += jnp.dot(x_ref[...], wt_ref[...],
                            preferred_element_type=jnp.float32)

    @pl.when(kk == pl.num_programs(2) - 1)
    def _finalize():
        o_ref[...] = (acc_ref[...] + b_ref[...]).astype(o_ref.dtype)


def pallas_linear(x2d, wt, b2, *, tm=512, tn=512, tk=512, out_dtype=None):
    """nn.Linear semantics with a pre-transposed weight:
    x2d [M, K] (bf16), wt = W^T [K, N] (bf16), b2 [1, N] (f32) -> [M, N]."""
    M, K = x2d.shape
    _, N = wt.shape
    if out_dtype is None:
        out_dtype = x2d.dtype
    tm = _pick_tile(M, tm, 8)
    tn = _pick_tile(N, tn, 128)
    tk = _pick_tile(K, tk, 128)
    # NOTE(v7x megacore): the "parallel" axes carry (M//tm) * (N//tn) blocks;
    # for decode-sized M consider shrinking tm so both cores stay busy.
    grid = (M // tm, N // tn, K // tk)
    itemsize = x2d.dtype.itemsize
    # x re-streamed once per output-column tile, W once per output-row tile.
    bytes_accessed = (M * K * (N // tn) + K * N * (M // tm) + M * N) * itemsize

    return pl.pallas_call(
        _linear_kernel,
        out_shape=jax.ShapeDtypeStruct((M, N), out_dtype),
        grid=grid,
        in_specs=[
            pl.BlockSpec((tm, tk), lambda i, j, k: (i, k)),
            pl.BlockSpec((tk, tn), lambda i, j, k: (k, j)),
            pl.BlockSpec((1, tn), lambda i, j, k: (0, j)),
        ],
        out_specs=pl.BlockSpec((tm, tn), lambda i, j, k: (i, j)),
        scratch_shapes=[pltpu.VMEM((tm, tn), jnp.float32)],
        compiler_params=pltpu.CompilerParams(
            dimension_semantics=("parallel", "parallel", "arbitrary"),
            vmem_limit_bytes=_VMEM_LIMIT_BYTES),
        cost_estimate=pl.CostEstimate(
            flops=2 * M * N * K, transcendentals=0,
            bytes_accessed=bytes_accessed),
    )(x2d, wt, b2)


# ----------------------------------------------------------------------------
# Kernel 2: fused packed-QKV projection (no concat on input, no split on output)
#   out_o = sum_c  x_c @ W_qkv[o*D:(o+1)*D, c*D:(c+1)*D]^T  + b[o*D:(o+1)*D]
# The 1/scale factor of attention is pre-folded into the o==0 (query) blocks.
# ----------------------------------------------------------------------------
def _qkv_proj_kernel(xq_ref, xk_ref, xv_ref, w_ref, b_ref,
                     oq_ref, ok_ref, ov_ref, accq, acck, accv):
    kk = pl.program_id(2)
    accs = (accq, acck, accv)
    outs = (oq_ref, ok_ref, ov_ref)

    @pl.when(kk == 0)
    def _init():
        for acc in accs:
            acc[...] = jnp.zeros_like(acc)

    xs = (xq_ref[...], xk_ref[...], xv_ref[...])
    for o in range(3):
        # Three separate accumulations (no summed temporaries): each MXU
        # result drains directly into the f32 accumulator (MRB-friendly on
        # v7x, lower vreg pressure everywhere).
        accs[o][...] += jnp.dot(xs[0], w_ref[0, o],
                                preferred_element_type=jnp.float32)
        accs[o][...] += jnp.dot(xs[1], w_ref[1, o],
                                preferred_element_type=jnp.float32)
        accs[o][...] += jnp.dot(xs[2], w_ref[2, o],
                                preferred_element_type=jnp.float32)

    @pl.when(kk == pl.num_programs(2) - 1)
    def _finalize():
        for o in range(3):
            outs[o][...] = (accs[o][...] + b_ref[o]).astype(outs[o].dtype)


def pallas_qkv_proj(xq, xk, xv, w_blocks, b3, *, tm=512, tn=512, tk=512):
    """Packed-QKV projection.  xq/xk/xv: [B*S, D] bf16 activations;
    w_blocks: pre-blocked transposed weight [3(in), 3(out), D, D] (bf16, scale
    folded into out-chunk 0); b3: bias [3, 1, D] (f32, scale folded into [0]).
    Returns (q, k, v), each [B*S, D] in the activation dtype."""
    M, D = xq.shape
    tm = _pick_tile(M, tm, 8)
    tn = _pick_tile(D, tn, 128)
    tk = _pick_tile(D, tk, 128)
    grid = (M // tm, D // tn, D // tk)

    x_spec = pl.BlockSpec((tm, tk), lambda i, j, k: (i, k))
    out_spec = pl.BlockSpec((tm, tn), lambda i, j, k: (i, j))
    out_sd = jax.ShapeDtypeStruct((M, D), xq.dtype)
    itemsize = xq.dtype.itemsize
    bytes_accessed = (3 * M * D * (D // tn)        # activations re-streamed
                      + 9 * D * D * (M // tm)      # weight blocks re-streamed
                      + 3 * M * D) * itemsize      # outputs written once

    return pl.pallas_call(
        _qkv_proj_kernel,
        out_shape=(out_sd, out_sd, out_sd),
        grid=grid,
        in_specs=[
            x_spec, x_spec, x_spec,
            pl.BlockSpec((3, 3, tk, tn), lambda i, j, k: (0, 0, k, j)),
            pl.BlockSpec((3, 1, tn), lambda i, j, k: (0, 0, j)),
        ],
        out_specs=(out_spec, out_spec, out_spec),
        scratch_shapes=[pltpu.VMEM((tm, tn), jnp.float32) for _ in range(3)],
        compiler_params=pltpu.CompilerParams(
            dimension_semantics=("parallel", "parallel", "arbitrary"),
            vmem_limit_bytes=_VMEM_LIMIT_BYTES),
        cost_estimate=pl.CostEstimate(
            flops=2 * M * (3 * D) * (3 * D), transcendentals=0,
            bytes_accessed=bytes_accessed),
    )(xq, xk, xv, w_blocks, b3)


# ----------------------------------------------------------------------------
# Kernel 3: flash-style attention, online softmax over a KV grid axis.
# One grid step = (one batch element, one q tile, one kv tile), all heads.
# The output is written lane-dense in combined-heads layout [B, S, H*hd]
# directly from the finalize (no XLA combine-heads transpose afterwards).
# ----------------------------------------------------------------------------
def _flash_attn_kernel(q_ref, k_ref, v_ref, o_ref, m_sc, l_sc, acc_sc, *,
                       n_heads, head_dim):
    ki = pl.program_id(2)

    @pl.when(ki == 0)
    def _init():
        m_sc[...] = jnp.full_like(m_sc, -jnp.inf)
        l_sc[...] = jnp.zeros_like(l_sc)
        acc_sc[...] = jnp.zeros_like(acc_sc)

    q = q_ref[0]                      # (H, tq, hd)  — 1/scale already in W_qkv
    k = k_ref[0]                      # (H, tkv, hd)
    v = v_ref[0]                      # (H, tkv, hd)

    # scores[h, q, k]: contract on the last axis of both operands
    # (no materialized transpose of k), f32 accumulation on the MXU.
    s = jnp.einsum("hqd,hkd->hqk", q, k, preferred_element_type=jnp.float32)

    m_prev = m_sc[...]
    m_new = jnp.maximum(m_prev, jnp.max(s, axis=-1, keepdims=True))
    alpha = jnp.exp(m_prev - m_new)                       # (H, tq, 1)  f32
    # TODO(synk): on v6e/v7x this exp could run in bf16 if the EUP is the
    # saturating unit (p is cast to v.dtype anyway); kept f32 for v5e.
    p = jnp.exp(s - m_new)                                # (H, tq, tkv) f32
    l_sc[...] = alpha * l_sc[...] + jnp.sum(p, axis=-1, keepdims=True)
    acc_sc[...] = alpha * acc_sc[...] + jnp.einsum(
        "hqk,hkd->hqd", p.astype(v.dtype), v, preferred_element_type=jnp.float32)
    m_sc[...] = m_new

    # TODO(synk): additive attention mask and training-mode dropout are not
    # wired in — inference path with mask=None only.
    @pl.when(ki == pl.num_programs(2) - 1)
    def _finalize():
        inv_l = pl.reciprocal(l_sc[...], approx=True)     # EUP, ~free slot
        out = acc_sc[...] * inv_l                         # (H, tq, hd) f32
        # Combine heads in VMEM: head h -> lanes [h*hd, (h+1)*hd) of the
        # (tq, H*hd) output block, so the HBM writeback is one contiguous
        # lane-dense DMA (no masked hd-wide stores, no XLA transpose pass).
        for h in range(n_heads):
            o_ref[0, :, h * head_dim:(h + 1) * head_dim] = (
                out[h].astype(o_ref.dtype))


def pallas_flash_attention(q, k, v, *, tq=256, tkv=256):
    """q, k, v: [B, H, S, hd] (scale pre-folded into q).
    Returns softmax(q k^T) v already in combined-heads layout [B, S, H*hd]."""
    B, H, S, hd = q.shape
    D = H * hd
    tq = _pick_tile(S, tq, 8)
    tkv = _pick_tile(S, tkv, 128)     # lane-dense score tiles along kv
    # NOTE(v7x megacore): parallel work = B * (S//tq) blocks; for B=1 decode
    # shapes shrink tq so both cores get work.
    grid = (B, S // tq, S // tkv)

    q_spec = pl.BlockSpec((1, H, tq, hd), lambda b, qi, ki: (b, 0, qi, 0))
    kv_spec = pl.BlockSpec((1, H, tkv, hd), lambda b, qi, ki: (b, 0, ki, 0))
    o_spec = pl.BlockSpec((1, tq, D), lambda b, qi, ki: (b, qi, 0))

    kernel = functools.partial(_flash_attn_kernel, n_heads=H, head_dim=hd)
    itemsize = q.dtype.itemsize
    bytes_accessed = (B * H * S * hd                     # q read once
                      + 2 * B * H * S * hd * (S // tq)   # k, v re-streamed
                      + B * S * D) * itemsize            # output written once

    return pl.pallas_call(
        kernel,
        out_shape=jax.ShapeDtypeStruct((B, S, D), q.dtype),
        grid=grid,
        in_specs=[q_spec, kv_spec, kv_spec],
        out_specs=o_spec,
        scratch_shapes=[
            # (H, tq, 1) scratch pads to 128 lanes; accepted (small vs acc).
            pltpu.VMEM((H, tq, 1), jnp.float32),   # running max
            pltpu.VMEM((H, tq, 1), jnp.float32),   # running sum
            pltpu.VMEM((H, tq, hd), jnp.float32),  # output accumulator
        ],
        compiler_params=pltpu.CompilerParams(
            dimension_semantics=("parallel", "parallel", "arbitrary"),
            vmem_limit_bytes=_VMEM_LIMIT_BYTES),
        cost_estimate=pl.CostEstimate(
            flops=4 * B * H * S * S * hd,
            transcendentals=B * H * S * S,
            bytes_accessed=bytes_accessed),
    )(q, k, v)


# ----------------------------------------------------------------------------
# Module wrapper (packed-QKV path of the PyTorch module, eval mode)
# ----------------------------------------------------------------------------
class MultiHeadAttentionPallas:
    def __init__(self, d_model: int, n_heads: int, dropout: float = 0.1,
                 bias: bool = True, *, compute_dtype=jnp.bfloat16,
                 key: jax.Array):
        if d_model % n_heads != 0:
            raise ValueError("d_model must be evenly divisible by n_heads")
        self.d_model = d_model
        self.n_heads = n_heads
        self.head_dim = d_model // n_heads
        self.scale = self.head_dim ** 0.5
        self.dropout = dropout  # inactive at inference
        self.compute_dtype = compute_dtype

        k1, k2, k3, k4 = jax.random.split(key, 4)
        lim_qkv = 1.0 / (3 * d_model) ** 0.5
        self.W_qkv = jax.random.uniform(k1, (3 * d_model, 3 * d_model),
                                        minval=-lim_qkv, maxval=lim_qkv,
                                        dtype=jnp.float32)
        self.b_qkv = jax.random.uniform(k2, (3 * d_model,),
                                        minval=-lim_qkv, maxval=lim_qkv,
                                        dtype=jnp.float32)
        lim_o = 1.0 / d_model ** 0.5
        self.W_o = jax.random.uniform(k3, (d_model, d_model),
                                      minval=-lim_o, maxval=lim_o,
                                      dtype=jnp.float32)
        self.b_o = jax.random.uniform(k4, (d_model,),
                                      minval=-lim_o, maxval=lim_o,
                                      dtype=jnp.float32)

        # Kernel-friendly parameter layouts, computed ONCE at init:
        #   Wqkv_blocks[c, o] = W_qkv[oD:(o+1)D, cD:(c+1)D]^T, bf16,
        #   with the attention 1/scale folded into the query chunk (o == 0).
        D = d_model
        inv_scale = 1.0 / self.scale
        w_blocks = jnp.transpose(self.W_qkv.reshape(3, D, 3, D),
                                 (2, 0, 3, 1))                  # [3, 3, D, D]
        w_blocks = w_blocks.at[:, 0].multiply(inv_scale)
        self.Wqkv_blocks = w_blocks.astype(compute_dtype)
        b3 = self.b_qkv.reshape(3, 1, D)
        self.b_qkv3 = b3.at[0].multiply(inv_scale)              # f32 bias
        self.Wt_o = self.W_o.T.astype(compute_dtype)            # [D(in), D(out)]
        self.b_o2 = self.b_o.reshape(1, D)                      # f32 bias

    def __call__(self, query, key, value, mask=None):
        # TODO(synk): additive attention mask (forward default mask=None) and
        # training-mode dropout are not wired into the kernels.
        B, S, D = query.shape
        H, hd = self.n_heads, self.head_dim
        M = B * S
        cdt = self.compute_dtype
        out_dtype = query.dtype

        xq = query.astype(cdt).reshape(M, D)
        xk = key.astype(cdt).reshape(M, D)
        xv = value.astype(cdt).reshape(M, D)

        # Packed-QKV projection: no concat on the input, no chunk on the
        # output, 1/scale already folded into the q chunk.
        q_p, k_p, v_p = pallas_qkv_proj(xq, xk, xv,
                                        self.Wqkv_blocks, self.b_qkv3)

        # split_heads: [B*S, D] -> [B, H, S, hd]
        # TODO(synk): these input-side transposes could be folded into the
        # attention BlockSpecs when head_dim % 128 == 0; kept as XLA
        # transposes for generality (head_dim < 128).
        to_heads = lambda x: x.reshape(B, S, H, hd).transpose(0, 2, 1, 3)
        qh, kh, vh = to_heads(q_p), to_heads(k_p), to_heads(v_p)

        # Flash-style attention; output is already [B, S, D] (combined heads,
        # lane-dense), so no combine_heads transpose is needed.
        attn = pallas_flash_attention(qh, kh, vh)

        out = pallas_linear(attn.reshape(M, D), self.Wt_o, self.b_o2,
                            out_dtype=out_dtype)
        return out.reshape(B, S, D)


# ----------------------------------------------------------------------------
# Pure-JAX reference for validation (mirrors the module's math; uses the same
# bf16 parameter / activation rounding points as the kernels so the comparison
# isolates kernel structure rather than bf16 quantization).
# ----------------------------------------------------------------------------
def reference_forward(mha, query, key, value):
    f32, cdt = jnp.float32, mha.compute_dtype
    B, S, D = query.shape
    H, hd = mha.n_heads, mha.head_dim

    q_in = query.astype(cdt).astype(f32)
    k_in = key.astype(cdt).astype(f32)
    v_in = value.astype(cdt).astype(f32)

    W_qkv = mha.W_qkv.astype(cdt).astype(f32)
    W_o = mha.W_o.astype(cdt).astype(f32)

    qkv = jnp.concatenate([q_in, k_in, v_in], axis=-1).reshape(B * S, 3 * D)
    qkv = (qkv @ W_qkv.T + mha.b_qkv).reshape(B, S, 3 * D)
    q, k, v = jnp.split(qkv, 3, axis=-1)
    q = q.astype(cdt).astype(f32)
    k = k.astype(cdt).astype(f32)
    v = v.astype(cdt).astype(f32)

    split = lambda x: x.reshape(B, S, H, hd).transpose(0, 2, 1, 3)
    q, k, v = split(q), split(k), split(v)
    scores = jnp.einsum("bhqd,bhkd->bhqk", q, k) / mha.scale
    probs = jax.nn.softmax(scores, axis=-1).astype(cdt).astype(f32)
    attn = jnp.einsum("bhqk,bhkd->bhqd", probs, v)
    attn = attn.transpose(0, 2, 1, 3).reshape(B * S, D).astype(cdt).astype(f32)
    out = attn @ W_o.T + mha.b_o
    return out.reshape(B, S, D)


if __name__ == "__main__":
    B, S, D, H = 2, 8, 32, 4
    root = jax.random.PRNGKey(0)
    k_param, kq, kk, kv = jax.random.split(root, 4)

    mha = MultiHeadAttentionPallas(d_model=D, n_heads=H, key=k_param)

    query = jax.random.normal(kq, (B, S, D), dtype=jnp.float32)
    key = jax.random.normal(kk, (B, S, D), dtype=jnp.float32)
    value = jax.random.normal(kv, (B, S, D), dtype=jnp.float32)

    out = jax.block_until_ready(mha(query, key, value))
    ref = reference_forward(mha, query, key, value)

    assert out.shape == (B, S, D)
    assert out.dtype == query.dtype
    # Tolerance absorbs bf16 compute, online-softmax reassociation and the
    # approx (EUP) reciprocal in the softmax normalization.
    max_err = float(jnp.max(jnp.abs(out - ref)))
    assert jnp.allclose(out, ref, atol=2e-2, rtol=2e-2), (
        f"Pallas output mismatch vs reference: max abs err {max_err}")

    print("KERNEL_OK")
</pallas_src>

<mosaic_0001>
module attributes {stable_mosaic.version = 11 : i64} {
  func.func @_qkv_proj_kernel(%arg0: i32, %arg1: i32, %arg2: i32, %arg3: memref<16x32xbf16, #tpu.memory_space<vmem>>, %arg4: memref<16x32xbf16, #tpu.memory_space<vmem>>, %arg5: memref<16x32xbf16, #tpu.memory_space<vmem>>, %arg6: memref<3x3x32x32xbf16, #tpu.memory_space<vmem>>, %arg7: memref<3x1x32xf32, #tpu.memory_space<vmem>>, %arg8: memref<16x32xbf16, #tpu.memory_space<vmem>>, %arg9: memref<16x32xbf16, #tpu.memory_space<vmem>>, %arg10: memref<16x32xbf16, #tpu.memory_space<vmem>>, %arg11: memref<16x32xf32, #tpu.memory_space<vmem>>, %arg12: memref<16x32xf32, #tpu.memory_space<vmem>>, %arg13: memref<16x32xf32, #tpu.memory_space<vmem>>) attributes {dimension_semantics = [#tpu.dimension_semantics<parallel>, #tpu.dimension_semantics<parallel>, #tpu.dimension_semantics<arbitrary>], iteration_bounds = array<i64: 1, 1, 1>, scalar_prefetch = 0 : i64, scratch_operands = 3 : i64, tpu.core_type = #tpu.core_type<tc>, window_params = [{transform_indices = @transform_0, window_bounds = array<i64: 16, 32>}, {transform_indices = @transform_1, window_bounds = array<i64: 16, 32>}, {transform_indices = @transform_2, window_bounds = array<i64: 16, 32>}, {transform_indices = @transform_3, window_bounds = array<i64: 3, 3, 32, 32>}, {transform_indices = @transform_4, window_bounds = array<i64: 3, 1, 32>}, {transform_indices = @transform_5, window_bounds = array<i64: 16, 32>}, {transform_indices = @transform_6, window_bounds = array<i64: 16, 32>}, {transform_indices = @transform_7, window_bounds = array<i64: 16, 32>}]} {
    %c0_i32 = arith.constant 0 : i32
    %0 = arith.cmpi eq, %arg2, %c0_i32 : i32
    %1 = arith.extui %0 : i1 to i32
    %c0_i32_0 = arith.constant 0 : i32
    %2 = arith.cmpi ne, %1, %c0_i32_0 : i32
    scf.if %2 {
      %cst_86 = arith.constant 0.000000e+00 : f32
      %63 = vector.broadcast %cst_86 : f32 to vector<16x32xf32>
      %c0_87 = arith.constant 0 : index
      %c0_88 = arith.constant 0 : index
      %64 = vector.load %arg11[%c0_87, %c0_88] : memref<16x32xf32, #tpu.memory_space<vmem>>, vector<16x32xf32>
      tpu.vector_store %arg11[%c0_87, %c0_88], %63 {strides = array<i32>} : memref<16x32xf32, #tpu.memory_space<vmem>>, vector<16x32xf32>,
      %cst_89 = arith.constant 0.000000e+00 : f32
      %65 = vector.broadcast %cst_89 : f32 to vector<16x32xf32>
      %c0_90 = arith.constant 0 : index
      %c0_91 = arith.constant 0 : index
      %66 = vector.load %arg12[%c0_90, %c0_91] : memref<16x32xf32, #tpu.memory_space<vmem>>, vector<16x32xf32>
      tpu.vector_store %arg12[%c0_90, %c0_91], %65 {strides = array<i32>} : memref<16x32xf32, #tpu.memory_space<vmem>>, vector<16x32xf32>,
      %cst_92 = arith.constant 0.000000e+00 : f32
      %67 = vector.broadcast %cst_92 : f32 to vector<16x32xf32>
      %c0_93 = arith.constant 0 : index
      %c0_94 = arith.constant 0 : index
      %68 = vector.load %arg13[%c0_93, %c0_94] : memref<16x32xf32, #tpu.memory_space<vmem>>, vector<16x32xf32>
      tpu.vector_store %arg13[%c0_93, %c0_94], %67 {strides = array<i32>} : memref<16x32xf32, #tpu.memory_space<vmem>>, vector<16x32xf32>,
    } else {
    }
    %c0 = arith.constant 0 : index
    %c0_1 = arith.constant 0 : index
    %3 = vector.load %arg3[%c0, %c0_1] : memref<16x32xbf16, #tpu.memory_space<vmem>>, vector<16x32xbf16>
    %c0_2 = arith.constant 0 : index
    %c0_3 = arith.constant 0 : index
    %4 = vector.load %arg4[%c0_2, %c0_3] : memref<16x32xbf16, #tpu.memory_space<vmem>>, vector<16x32xbf16>
    %c0_4 = arith.constant 0 : index
    %c0_5 = arith.constant 0 : index
    %5 = vector.load %arg5[%c0_4, %c0_5] : memref<16x32xbf16, #tpu.memory_space<vmem>>, vector<16x32xbf16>
    %c0_6 = arith.constant 0 : index
    %c0_7 = arith.constant 0 : index
    %6 = vector.load %arg11[%c0_6, %c0_7] : memref<16x32xf32, #tpu.memory_space<vmem>>, vector<16x32xf32>
    %c0_8 = arith.constant 0 : index
    %c0_9 = arith.constant 0 : index
    %c0_10 = arith.constant 0 : index
    %c0_11 = arith.constant 0 : index
    %7 = vector.load %arg6[%c0_8, %c0_9, %c0_10, %c0_11] : memref<3x3x32x32xbf16, #tpu.memory_space<vmem>>, vector<1x1x32x32xbf16>
    %8 = vector.shape_cast %7 : vector<1x1x32x32xbf16> to vector<32x32xbf16>
    %cst = arith.constant dense<0.000000e+00> : vector<16x32xf32>
    %9 = tpu.matmul %3, %8, %cst {dimension_numbers = #tpu.dot_dimension_numbers<[1], [0], [0], [1], [0, 0, 1, 1], [], []>} : vector<16x32xbf16>, vector<32x32xbf16>, vector<16x32xf32> -> vector<16x32xf32>
    %10 = arith.addf %6, %9 : vector<16x32xf32>
    %c0_12 = arith.constant 0 : index
    %c0_13 = arith.constant 0 : index
    %11 = vector.load %arg11[%c0_12, %c0_13] : memref<16x32xf32, #tpu.memory_space<vmem>>, vector<16x32xf32>
    tpu.vector_store %arg11[%c0_12, %c0_13], %10 {strides = array<i32>} : memref<16x32xf32, #tpu.memory_space<vmem>>, vector<16x32xf32>,
    %c0_14 = arith.constant 0 : index
    %c0_15 = arith.constant 0 : index
    %12 = vector.load %arg11[%c0_14, %c0_15] : memref<16x32xf32, #tpu.memory_space<vmem>>, vector<16x32xf32>
    %c1 = arith.constant 1 : index
    %c0_16 = arith.constant 0 : index
    %c0_17 = arith.constant 0 : index
    %c0_18 = arith.constant 0 : index
    %13 = vector.load %arg6[%c1, %c0_16, %c0_17, %c0_18] : memref<3x3x32x32xbf16, #tpu.memory_space<vmem>>, vector<1x1x32x32xbf16>
    %14 = vector.shape_cast %13 : vector<1x1x32x32xbf16> to vector<32x32xbf16>
    %cst_19 = arith.constant dense<0.000000e+00> : vector<16x32xf32>
    %15 = tpu.matmul %4, %14, %cst_19 {dimension_numbers = #tpu.dot_dimension_numbers<[1], [0], [0], [1], [0, 0, 1, 1], [], []>} : vector<16x32xbf16>, vector<32x32xbf16>, vector<16x32xf32> -> vector<16x32xf32>
    %16 = arith.addf %12, %15 : vector<16x32xf32>
    %c0_20 = arith.constant 0 : index
    %c0_21 = arith.constant 0 : index
    %17 = vector.load %arg11[%c0_20, %c0_21] : memref<16x32xf32, #tpu.memory_space<vmem>>, vector<16x32xf32>
    tpu.vector_store %arg11[%c0_20, %c0_21], %16 {strides = array<i32>} : memref<16x32xf32, #tpu.memory_space<vmem>>, vector<16x32xf32>,
    %c0_22 = arith.constant 0 : index
    %c0_23 = arith.constant 0 : index
    %18 = vector.load %arg11[%c0_22, %c0_23] : memref<16x32xf32, #tpu.memory_space<vmem>>, vector<16x32xf32>
    %c2 = arith.constant 2 : index
    %c0_24 = arith.constant 0 : index
    %c0_25 = arith.constant 0 : index
    %c0_26 = arith.constant 0 : index
    %19 = vector.load %arg6[%c2, %c0_24, %c0_25, %c0_26] : memref<3x3x32x32xbf16, #tpu.memory_space<vmem>>, vector<1x1x32x32xbf16>
    %20 = vector.shape_cast %19 : vector<1x1x32x32xbf16> to vector<32x32xbf16>
    %cst_27 = arith.constant dense<0.000000e+00> : vector<16x32xf32>
    %21 = tpu.matmul %5, %20, %cst_27 {dimension_numbers = #tpu.dot_dimension_numbers<[1], [0], [0], [1], [0, 0, 1, 1], [], []>} : vector<16x32xbf16>, vector<32x32xbf16>, vector<16x32xf32> -> vector<16x32xf32>
    %22 = arith.addf %18, %21 : vector<16x32xf32>
    %c0_28 = arith.constant 0 : index
    %c0_29 = arith.constant 0 : index
    %23 = vector.load %arg11[%c0_28, %c0_29] : memref<16x32xf32, #tpu.memory_space<vmem>>, vector<16x32xf32>
    tpu.vector_store %arg11[%c0_28, %c0_29], %22 {strides = array<i32>} : memref<16x32xf32, #tpu.memory_space<vmem>>, vector<16x32xf32>,
    %c0_30 = arith.constant 0 : index
    %c0_31 = arith.constant 0 : index
    %24 = vector.load %arg12[%c0_30, %c0_31] : memref<16x32xf32, #tpu.memory_space<vmem>>, vector<16x32xf32>
    %c0_32 = arith.constant 0 : index
    %c1_33 = arith.constant 1 : index
    %c0_34 = arith.constant 0 : index
    %c0_35 = arith.constant 0 : index
    %25 = vector.load %arg6[%c0_32, %c1_33, %c0_34, %c0_35] : memref<3x3x32x32xbf16, #tpu.memory_space<vmem>>, vector<1x1x32x32xbf16>
    %26 = vector.shape_cast %25 : vector<1x1x32x32xbf16> to vector<32x32xbf16>
    %cst_36 = arith.constant dense<0.000000e+00> : vector<16x32xf32>
    %27 = tpu.matmul %3, %26, %cst_36 {dimension_numbers = #tpu.dot_dimension_numbers<[1], [0], [0], [1], [0, 0, 1, 1], [], []>} : vector<16x32xbf16>, vector<32x32xbf16>, vector<16x32xf32> -> vector<16x32xf32>
    %28 = arith.addf %24, %27 : vector<16x32xf32>
    %c0_37 = arith.constant 0 : index
    %c0_38 = arith.constant 0 : index
    %29 = vector.load %arg12[%c0_37, %c0_38] : memref<16x32xf32, #tpu.memory_space<vmem>>, vector<16x32xf32>
    tpu.vector_store %arg12[%c0_37, %c0_38], %28 {strides = array<i32>} : memref<16x32xf32, #tpu.memory_space<vmem>>, vector<16x32xf32>,
    %c0_39 = arith.constant 0 : index
    %c0_40 = arith.constant 0 : index
    %30 = vector.load %arg12[%c0_39, %c0_40] : memref<16x32xf32, #tpu.memory_space<vmem>>, vector<16x32xf32>
    %c1_41 = arith.constant 1 : index
    %c1_42 = arith.constant 1 : index
    %c0_43 = arith.constant 0 : index
    %c0_44 = arith.constant 0 : index
    %31 = vector.load %arg6[%c1_41, %c1_42, %c0_43, %c0_44] : memref<3x3x32x32xbf16, #tpu.memory_space<vmem>>, vector<1x1x32x32xbf16>
    %32 = vector.shape_cast %31 : vector<1x1x32x32xbf16> to vector<32x32xbf16>
    %cst_45 = arith.constant dense<0.000000e+00> : vector<16x32xf32>
    %33 = tpu.matmul %4, %32, %cst_45 {dimension_numbers = #tpu.dot_dimension_numbers<[1], [0], [0], [1], [0, 0, 1, 1], [], []>} : vector<16x32xbf16>, vector<32x32xbf16>, vector<16x32xf32> -> vector<16x32xf32>
    %34 = arith.addf %30, %33 : vector<16x32xf32>
    %c0_46 = arith.constant 0 : index
    %c0_47 = arith.constant 0 : index
    %35 = vector.load %arg12[%c0_46, %c0_47] : memref<16x32xf32, #tpu.memory_space<vmem>>, vector<16x32xf32>
    tpu.vector_store %arg12[%c0_46, %c0_47], %34 {strides = array<i32>} : memref<16x32xf32, #tpu.memory_space<vmem>>, vector<16x32xf32>,
    %c0_48 = arith.constant 0 : index
    %c0_49 = arith.constant 0 : index
    %36 = vector.load %arg12[%c0_48, %c0_49] : memref<16x32xf32, #tpu.memory_space<vmem>>, vector<16x32xf32>
    %c2_50 = arith.constant 2 : index
    %c1_51 = arith.constant 1 : index
    %c0_52 = arith.constant 0 : index
    %c0_53 = arith.constant 0 : index
    %37 = vector.load %arg6[%c2_50, %c1_51, %c0_52, %c0_53] : memref<3x3x32x32xbf16, #tpu.memory_space<vmem>>, vector<1x1x32x32xbf16>
    %38 = vector.shape_cast %37 : vector<1x1x32x32xbf16> to vector<32x32xbf16>
    %cst_54 = arith.constant dense<0.000000e+00> : vector<16x32xf32>
    %39 = tpu.matmul %5, %38, %cst_54 {dimension_numbers = #tpu.dot_dimension_numbers<[1], [0], [0], [1], [0, 0, 1, 1], [], []>} : vector<16x32xbf16>, vector<32x32xbf16>, vector<16x32xf32> -> vector<16x32xf32>
    %40 = arith.addf %36, %39 : vector<16x32xf32>
    %c0_55 = arith.constant 0 : index
    %c0_56 = arith.constant 0 : index
    %41 = vector.load %arg12[%c0_55, %c0_56] : memref<16x32xf32, #tpu.memory_space<vmem>>, vector<16x32xf32>
    tpu.vector_store %arg12[%c0_55, %c0_56], %40 {strides = array<i32>} : memref<16x32xf32, #tpu.memory_space<vmem>>, vector<16x32xf32>,
    %c0_57 = arith.constant 0 : index
    %c0_58 = arith.constant 0 : index
    %42 = vector.load %arg13[%c0_57, %c0_58] : memref<16x32xf32, #tpu.memory_space<vmem>>, vector<16x32xf32>
    %c0_59 = arith.constant 0 : index
    %c2_60 = arith.constant 2 : index
    %c0_61 = arith.constant 0 : index
    %c0_62 = arith.constant 0 : index
    %43 = vector.load %arg6[%c0_59, %c2_60, %c0_61, %c0_62] : memref<3x3x32x32xbf16, #tpu.memory_space<vmem>>, vector<1x1x32x32xbf16>
    %44 = vector.shape_cast %43 : vector<1x1x32x32xbf16> to vector<32x32xbf16>
    %cst_63 = arith.constant dense<0.000000e+00> : vector<16x32xf32>
    %45 = tpu.matmul %3, %44, %cst_63 {dimension_numbers = #tpu.dot_dimension_numbers<[1], [0], [0], [1], [0, 0, 1, 1], [], []>} : vector<16x32xbf16>, vector<32x32xbf16>, vector<16x32xf32> -> vector<16x32xf32>
    %46 = arith.addf %42, %45 : vector<16x32xf32>
    %c0_64 = arith.constant 0 : index
    %c0_65 = arith.constant 0 : index
    %47 = vector.load %arg13[%c0_64, %c0_65] : memref<16x32xf32, #tpu.memory_space<vmem>>, vector<16x32xf32>
    tpu.vector_store %arg13[%c0_64, %c0_65], %46 {strides = array<i32>} : memref<16x32xf32, #tpu.memory_space<vmem>>, vector<16x32xf32>,
    %c0_66 = arith.constant 0 : index
    %c0_67 = arith.constant 0 : index
    %48 = vector.load %arg13[%c0_66, %c0_67] : memref<16x32xf32, #tpu.memory_space<vmem>>, vector<16x32xf32>
    %c1_68 = arith.constant 1 : index
    %c2_69 = arith.constant 2 : index
    %c0_70 = arith.constant 0 : index
    %c0_71 = arith.constant 0 : index
    %49 = vector.load %arg6[%c1_68, %c2_69, %c0_70, %c0_71] : memref<3x3x32x32xbf16, #tpu.memory_space<vmem>>, vector<1x1x32x32xbf16>
    %50 = vector.shape_cast %49 : vector<1x1x32x32xbf16> to vector<32x32xbf16>
    %cst_72 = arith.constant dense<0.000000e+00> : vector<16x32xf32>
    %51 = tpu.matmul %4, %50, %cst_72 {dimension_numbers = #tpu.dot_dimension_numbers<[1], [0], [0], [1], [0, 0, 1, 1], [], []>} : vector<16x32xbf16>, vector<32x32xbf16>, vector<16x32xf32> -> vector<16x32xf32>
    %52 = arith.addf %48, %51 : vector<16x32xf32>
    %c0_73 = arith.constant 0 : index
    %c0_74 = arith.constant 0 : index
    %53 = vector.load %arg13[%c0_73, %c0_74] : memref<16x32xf32, #tpu.memory_space<vmem>>, vector<16x32xf32>
    tpu.vector_store %arg13[%c0_73, %c0_74], %52 {strides = array<i32>} : memref<16x32xf32, #tpu.memory_space<vmem>>, vector<16x32xf32>,
    %c0_75 = arith.constant 0 : index
    %c0_76 = arith.constant 0 : index
    %54 = vector.load %arg13[%c0_75, %c0_76] : memref<16x32xf32, #tpu.memory_space<vmem>>, vector<16x32xf32>
    %c2_77 = arith.constant 2 : index
    %c2_78 = arith.constant 2 : index
    %c0_79 = arith.constant 0 : index
    %c0_80 = arith.constant 0 : index
    %55 = vector.load %arg6[%c2_77, %c2_78, %c0_79, %c0_80] : memref<3x3x32x32xbf16, #tpu.memory_space<vmem>>, vector<1x1x32x32xbf16>
    %56 = vector.shape_cast %55 : vector<1x1x32x32xbf16> to vector<32x32xbf16>
    %cst_81 = arith.constant dense<0.000000e+00> : vector<16x32xf32>
    %57 = tpu.matmul %5, %56, %cst_81 {dimension_numbers = #tpu.dot_dimension_numbers<[1], [0], [0], [1], [0, 0, 1, 1], [], []>} : vector<16x32xbf16>, vector<32x32xbf16>, vector<16x32xf32> -> vector<16x32xf32>
    %58 = arith.addf %54, %57 : vector<16x32xf32>
    %c0_82 = arith.constant 0 : index
    %c0_83 = arith.constant 0 : index
    %59 = vector.load %arg13[%c0_82, %c0_83] : memref<16x32xf32, #tpu.memory_space<vmem>>, vector<16x32xf32>
    tpu.vector_store %arg13[%c0_82, %c0_83], %58 {strides = array<i32>} : memref<16x32xf32, #tpu.memory_space<vmem>>, vector<16x32xf32>,
    %c0_i32_84 = arith.constant 0 : i32
    %60 = arith.cmpi eq, %arg2, %c0_i32_84 : i32
    %61 = arith.extui %60 : i1 to i32
    %c0_i32_85 = arith.constant 0 : i32
    %62 = arith.cmpi ne, %61, %c0_i32_85 : i32
    scf.if %62 {
      %c0_86 = arith.constant 0 : index
      %c0_87 = arith.constant 0 : index
      %63 = vector.load %arg11[%c0_86, %c0_87] : memref<16x32xf32, #tpu.memory_space<vmem>>, vector<16x32xf32>
      %c0_88 = arith.constant 0 : index
      %c0_89 = arith.constant 0 : index
      %c0_90 = arith.constant 0 : index
      %64 = vector.load %arg7[%c0_88, %c0_89, %c0_90] : memref<3x1x32xf32, #tpu.memory_space<vmem>>, vector<1x1x32xf32>
      %65 = vector.shape_cast %64 : vector<1x1x32xf32> to vector<1x32xf32>
      %66 = vector.broadcast %65 : vector<1x32xf32> to vector<16x32xf32>
      %67 = arith.addf %63, %66 : vector<16x32xf32>
      %68 = arith.truncf %67 : vector<16x32xf32> to vector<16x32xbf16>
      %c0_91 = arith.constant 0 : index
      %c0_92 = arith.constant 0 : index
      %69 = vector.load %arg8[%c0_91, %c0_92] : memref<16x32xbf16, #tpu.memory_space<vmem>>, vector<16x32xbf16>
      tpu.vector_store %arg8[%c0_91, %c0_92], %68 {strides = array<i32>} : memref<16x32xbf16, #tpu.memory_space<vmem>>, vector<16x32xbf16>,
      %c0_93 = arith.constant 0 : index
      %c0_94 = arith.constant 0 : index
      %70 = vector.load %arg12[%c0_93, %c0_94] : memref<16x32xf32, #tpu.memory_space<vmem>>, vector<16x32xf32>
      %c1_95 = arith.constant 1 : index
      %c0_96 = arith.constant 0 : index
      %c0_97 = arith.constant 0 : index
      %71 = vector.load %arg7[%c1_95, %c0_96, %c0_97] : memref<3x1x32xf32, #tpu.memory_space<vmem>>, vector<1x1x32xf32>
      %72 = vector.shape_cast %71 : vector<1x1x32xf32> to vector<1x32xf32>
      %73 = vector.broadcast %72 : vector<1x32xf32> to vector<16x32xf32>
      %74 = arith.addf %70, %73 : vector<16x32xf32>
      %75 = arith.truncf %74 : vector<16x32xf32> to vector<16x32xbf16>
      %c0_98 = arith.constant 0 : index
      %c0_99 = arith.constant 0 : index
      %76 = vector.load %arg9[%c0_98, %c0_99] : memref<16x32xbf16, #tpu.memory_space<vmem>>, vector<16x32xbf16>
      tpu.vector_store %arg9[%c0_98, %c0_99], %75 {strides = array<i32>} : memref<16x32xbf16, #tpu.memory_space<vmem>>, vector<16x32xbf16>,
      %c0_100 = arith.constant 0 : index
      %c0_101 = arith.constant 0 : index
      %77 = vector.load %arg13[%c0_100, %c0_101] : memref<16x32xf32, #tpu.memory_space<vmem>>, vector<16x32xf32>
      %c2_102 = arith.constant 2 : index
      %c0_103 = arith.constant 0 : index
      %c0_104 = arith.constant 0 : index
      %78 = vector.load %arg7[%c2_102, %c0_103, %c0_104] : memref<3x1x32xf32, #tpu.memory_space<vmem>>, vector<1x1x32xf32>
      %79 = vector.shape_cast %78 : vector<1x1x32xf32> to vector<1x32xf32>
      %80 = vector.broadcast %79 : vector<1x32xf32> to vector<16x32xf32>
      %81 = arith.addf %77, %80 : vector<16x32xf32>
      %82 = arith.truncf %81 : vector<16x32xf32> to vector<16x32xbf16>
      %c0_105 = arith.constant 0 : index
      %c0_106 = arith.constant 0 : index
      %83 = vector.load %arg10[%c0_105, %c0_106] : memref<16x32xbf16, #tpu.memory_space<vmem>>, vector<16x32xbf16>
      tpu.vector_store %arg10[%c0_105, %c0_106], %82 {strides = array<i32>} : memref<16x32xbf16, #tpu.memory_space<vmem>>, vector<16x32xbf16>,
    } else {
    }
    return
  }
  func.func @transform_0(%arg0: i32, %arg1: i32, %arg2: i32) -> (i32, i32) {
    %c0_i32 = arith.constant 0 : i32
    return %arg0, %arg2 : i32, i32
  }
  func.func @transform_1(%arg0: i32, %arg1: i32, %arg2: i32) -> (i32, i32) {
    %c0_i32 = arith.constant 0 : i32
    return %arg0, %arg2 : i32, i32
  }
  func.func @transform_2(%arg0: i32, %arg1: i32, %arg2: i32) -> (i32, i32) {
    %c0_i32 = arith.constant 0 : i32
    return %arg0, %arg2 : i32, i32
  }
  func.func @transform_3(%arg0: i32, %arg1: i32, %arg2: i32) -> (i32, i32, i32, i32) {
    %c0_i32 = arith.constant 0 : i32
    %c0_i32_0 = arith.constant 0 : i32
    %c0_i32_1 = arith.constant 0 : i32
    return %c0_i32, %c0_i32_0, %arg2, %arg1 : i32, i32, i32, i32
  }
  func.func @transform_4(%arg0: i32, %arg1: i32, %arg2: i32) -> (i32, i32, i32) {
    %c0_i32 = arith.constant 0 : i32
    %c0_i32_0 = arith.constant 0 : i32
    %c0_i32_1 = arith.constant 0 : i32
    return %c0_i32, %c0_i32_0, %arg1 : i32, i32, i32
  }
  func.func @transform_5(%arg0: i32, %arg1: i32, %arg2: i32) -> (i32, i32) {
    %c0_i32 = arith.constant 0 : i32
    return %arg0, %arg1 : i32, i32
  }
  func.func @transform_6(%arg0: i32, %arg1: i32, %arg2: i32) -> (i32, i32) {
    %c0_i32 = arith.constant 0 : i32
    return %arg0, %arg1 : i32, i32
  }
  func.func @transform_7(%arg0: i32, %arg1: i32, %arg2: i32) -> (i32, i32) {
    %c0_i32 = arith.constant 0 : i32
    return %arg0, %arg1 : i32, i32
  }
}

</mosaic_0001>

<llo_original>
// kernel: tpu_custom_call.1
$region0: #{tpu_custom_call.1}
  #allocation0 [shape = 'u32[]', space=smem, size = 0x4, offset = 0x4, fixed_abs, tag = 'smem constant byte address 0x4 - core index']
  #allocation1 [shape = 'u32[144,128]{1,0:T(1,128)}', space=vmem, size = 0x12000, scoped, tag = 'internal scratch']
  #allocation2 [shape = 'f32[16,32]{1,0:T(8,128)}', space=vmem, size = 0x2000, scoped, tag = 'scratch operand']
  #allocation3 [shape = 'f32[16,32]{1,0:T(8,128)}', space=vmem, size = 0x2000, scoped, tag = 'scratch operand']
  #allocation4 [shape = 'f32[16,32]{1,0:T(8,128)}', space=vmem, size = 0x2000, scoped, tag = 'scratch operand']
  %s0 = inlined_call_operand.hbm [shape: bf16[16,32], index: 0, kind: input, shape index: {}]
  %s1 = inlined_call_operand.hbm [shape: bf16[16,32], index: 1, kind: input, shape index: {}]
  %s2 = inlined_call_operand.hbm [shape: bf16[16,32], index: 2, kind: input, shape index: {}]
  %s3 = inlined_call_operand.hbm [shape: bf16[3,3,32,32], index: 3, kind: input, shape index: {}]
  %s4 = inlined_call_operand.vmem [shape: f32[3,1,32], index: 4, kind: input, shape index: {}]
  %s5 = inlined_call_operand.hbm [shape: bf16[16,32], index: 5, kind: output, shape index: {0}]
  %s6 = inlined_call_operand.hbm [shape: bf16[16,32], index: 6, kind: output, shape index: {1}]
  %s7 = inlined_call_operand.hbm [shape: bf16[16,32], index: 7, kind: output, shape index: {2}]
  %8 = xla_tuple %s5, %s6, %s7
  %s9 = sld [smem:[#allocation0]]
  $region70: #{tpu_custom_call.1} parent=0
    _
  %s11 = ssub.s32 1, %s9
  %s12 = scalar_select 0, %s11, %s9
  $region1: #{tpu_custom_call.1} parent=0
    #allocation5 [shape = 'u8[4096]{0}', space=vmem, size = 0x1000, scoped, tag = 'input window, operand 0, single buffered']
    #allocation6 [shape = 's32[1]{0}', space=sflag, size = 0x4, scoped, tag = 'scoped memory for tpu_custom_call.1']
    #allocation7 [shape = 's32[1]{0}', space=sflag, size = 0x4, scoped, tag = 'scoped memory for tpu_custom_call.1']
    #allocation8 [shape = 'u8[4096]{0}', space=vmem, size = 0x1000, scoped, tag = 'input window, operand 1, single buffered']
    #allocation9 [shape = 's32[1]{0}', space=sflag, size = 0x4, scoped, tag = 'scoped memory for tpu_custom_call.1']
    #allocation10 [shape = 'u8[4096]{0}', space=vmem, size = 0x1000, scoped, tag = 'input window, operand 2, single buffered']
    #allocation11 [shape = 'u8[73728]{0}', space=vmem, size = 0x12000, scoped, tag = 'input window, operand 3, single buffered']
    #allocation12 [shape = 's32[1]{0}', space=sflag, size = 0x4, scoped, tag = 'scoped memory for tpu_custom_call.1']
    #allocation13 [shape = 'u8[4096]{0}', space=vmem, size = 0x1000, scoped, tag = 'output window, operand 0, single buffered']
    #allocation14 [shape = 'u8[4096]{0}', space=vmem, size = 0x1000, scoped, tag = 'output window, operand 1, single buffered']
    #allocation15 [shape = 's32[1]{0}', space=sflag, size = 0x4, scoped, tag = 'scoped memory for tpu_custom_call.1']
    #allocation16 [shape = 'u8[4096]{0}', space=vmem, size = 0x1000, scoped, tag = 'output window, operand 2, single buffered']
    %13 = vsyncpa [#allocation6], 0
    %14 = vsyncpa [#allocation9], 0
    %15 = vsyncpa [#allocation12], 0
    %16 = vsyncpa [#allocation7], 0
    %17 = vsyncpa [#allocation15], 0
    // Predicated region
    $region2: #{tpu_custom_call.1} parent=1 // pred_check
      _
    $region3: #{tpu_custom_call.1} parent=1 // pred_check_branch
      %19 = sbr.rel (0) target = $region5
    $region4: #{tpu_custom_call.1} parent=1 // pred_region
      %s21 = ssub.s32 128, 128
      %22 = vsyncadd [#allocation6], %s21
      %s23 = sshll.u32 [#allocation5], 4
      %s24 = int_to_ptr.vmem [resolvable:$true] %s23
      %29 = dma.hbm_to_vmem [thread:$0]  %s0, 128, %s24, [#allocation6], 64, 64, 4
    $region5: #{tpu_custom_call.1} parent=1 // pred_fallthru
      _
    // Predicated region
    $region6: #{tpu_custom_call.1} parent=1 // pred_check
      _
    $region7: #{tpu_custom_call.1} parent=1 // pred_check_branch
      %31 = sbr.rel (0) target = $region9
    $region8: #{tpu_custom_call.1} parent=1 // pred_region
      %s33 = ssub.s32 128, 128
      %34 = vsyncadd [#allocation9], %s33
      %s35 = sshll.u32 [#allocation8], 4
      %s36 = int_to_ptr.vmem [resolvable:$true] %s35
      %41 = dma.hbm_to_vmem [thread:$0]  %s1, 128, %s36, [#allocation9], 64, 64, 4
    $region9: #{tpu_custom_call.1} parent=1 // pred_fallthru
      _
    // Predicated region
    $region10: #{tpu_custom_call.1} parent=1 // pred_check
      _
    $region11: #{tpu_custom_call.1} parent=1 // pred_check_branch
      %43 = sbr.rel (0) target = $region13
    $region12: #{tpu_custom_call.1} parent=1 // pred_region
      %s45 = ssub.s32 128, 128
      %46 = vsyncadd [#allocation9], %s45
      %s47 = sshll.u32 [#allocation10], 4
      %s48 = int_to_ptr.vmem [resolvable:$true] %s47
      %53 = dma.hbm_to_vmem [thread:$0]  %s2, 128, %s48, [#allocation9], 64, 64, 4
    $region13: #{tpu_custom_call.1} parent=1 // pred_fallthru
      _
    // Predicated region
    $region14: #{tpu_custom_call.1} parent=1 // pred_check
      _
    $region15: #{tpu_custom_call.1} parent=1 // pred_check_branch
      %55 = sbr.rel (0) target = $region17
    $region16: #{tpu_custom_call.1} parent=1 // pred_region
      %s57 = ssub.s32 2304, 2304
      %58 = vsyncadd [#allocation12], %s57
      %s59 = sshll.u32 [#allocation11], 4
      %s60 = int_to_ptr.vmem [resolvable:$true] %s59
      %65 = dma.hbm_to_vmem [thread:$0]  %s3, 2304, %s60, [#allocation12], 64, 64, 4
    $region17: #{tpu_custom_call.1} parent=1 // pred_fallthru
      _
    // Predicated region
    $region18: #{tpu_custom_call.1} parent=1 // pred_check
      _
    $region19: #{tpu_custom_call.1} parent=1 // pred_check_branch
      %67 = sbr.rel (0) target = $region21
    $region20: #{tpu_custom_call.1} parent=1 // pred_region
      _
    $region21: #{tpu_custom_call.1} parent=1 // pred_fallthru
      _
    // Predicated region
    $region22: #{tpu_custom_call.1} parent=1 // pred_check
      _
    $region23: #{tpu_custom_call.1} parent=1 // pred_check_branch
      %69 = sbr.rel (0) target = $region25
    $region24: #{tpu_custom_call.1} parent=1 // pred_region
      %70 = dma.done [#allocation6], 128
    $region25: #{tpu_custom_call.1} parent=1 // pred_fallthru
      _
    // Predicated region
    $region26: #{tpu_custom_call.1} parent=1 // pred_check
      _
    $region27: #{tpu_custom_call.1} parent=1 // pred_check_branch
      %72 = sbr.rel (0) target = $region29
    $region28: #{tpu_custom_call.1} parent=1 // pred_region
      %73 = dma.done [#allocation9], 128
    $region29: #{tpu_custom_call.1} parent=1 // pred_fallthru
      _
    // Predicated region
    $region30: #{tpu_custom_call.1} parent=1 // pred_check
      _
    $region31: #{tpu_custom_call.1} parent=1 // pred_check_branch
      %75 = sbr.rel (0) target = $region33
    $region32: #{tpu_custom_call.1} parent=1 // pred_region
      %76 = dma.done [#allocation9], 128
    $region33: #{tpu_custom_call.1} parent=1 // pred_fallthru
      _
    // Predicated region
    $region34: #{tpu_custom_call.1} parent=1 // pred_check
      _
    $region35: #{tpu_custom_call.1} parent=1 // pred_check_branch
      %78 = sbr.rel (0) target = $region37
    $region36: #{tpu_custom_call.1} parent=1 // pred_region
      %79 = dma.done [#allocation12], 2304
    $region37: #{tpu_custom_call.1} parent=1 // pred_fallthru
      _
    %p81 = scmp.eq.s32.totalorder 0, 0
    // Predicated region
    $region38: #{tpu_custom_call.1} parent=1 // pred_check
      %p82 = pneg %p81
    $region39: #{tpu_custom_call.1} parent=1 // pred_check_branch
      %84 = sbr.rel (%p82) target = $region41
    $region40: #{tpu_custom_call.1} parent=1 // pred_region
      %vm85 = vcmask 261120
      %86 = vst.msk [vmem:[#allocation2] sm:$0xff] %vm85, 0.0
      %87 = vst.msk [vmem:[#allocation2 + $0x8] sm:$0xff] %vm85, 0.0
      %88 = vst.msk [vmem:[#allocation3] sm:$0xff] %vm85, 0.0
      %89 = vst.msk [vmem:[#allocation3 + $0x8] sm:$0xff] %vm85, 0.0
      %90 = vst.msk [vmem:[#allocation4] sm:$0xff] %vm85, 0.0
      %91 = vst.msk [vmem:[#allocation4 + $0x8] sm:$0xff] %vm85, 0.0
    $region41: #{tpu_custom_call.1} parent=1 // pred_fallthru
      _
    %v92 = vld [vmem:[#allocation5] sm:$0xf]
    %v93 = vld [vmem:[#allocation5 + $0x4] sm:$0xf]
    %v94 = vld [vmem:[#allocation8] sm:$0xf]
    %v95 = vld [vmem:[#allocation8 + $0x4] sm:$0xf]
    %v96 = vld [vmem:[#allocation10] sm:$0xf]
    %v97 = vld [vmem:[#allocation10 + $0x4] sm:$0xf]
    %v98 = vld [vmem:[#allocation2] sm:$0xff]
    %v99 = vld [vmem:[#allocation2 + $0x8] sm:$0xff]
    %v100 = vld [vmem:[#allocation11] sm:$0xf]
    %v101 = vld [vmem:[#allocation11 + $0x4] sm:$0xf]
    %v102 = vld [vmem:[#allocation11 + $0x8] sm:$0xf]
    %v103 = vld [vmem:[#allocation11 + $0xc] sm:$0xf]
    %v106 = vunpack.c.l.b16 %v92
    %v107 = vunpack.c.l.b16 %v93
    %v108 = vpack.c.b16 %v107, %v106
    %v113 = vunpack.c.l.b16 %v100
    %v114 = vunpack.c.l.b16 %v101
    %v115 = vunpack.c.l.b16 %v102
    %v116 = vunpack.c.l.b16 %v103
    %v117 = vpack.c.b16 %v114, %v113
    %v118 = vpack.c.b16 %v116, %v115
    %vm121 = vcmask 261120
    %v123 = vsel %vm121, %v108, 0
    %125 = vmatprep.subr.bf16.mxu0 0
    %126 = vmatpush1.bf16.msra.mxu0 %v117
    %127 = vmatprep.subr.bf16.mxu0 0
    %128 = vmatpush1.bf16.msra.mxu0 %v118
    %129 = vmatprep.subr.bf16.mxu0 0
    %130 = vmatpush1.bf16.msra.mxu0 0
    %131 = vmatprep.subr.bf16.mxu0 0
    %132 = vmatpush1.bf16.msra.mxu0 0
    %133 = vmatprep.subr.bf16.mxu0 0
    %134 = vmatpush1.bf16.msra.mxu0 0
    %135 = vmatprep.subr.bf16.mxu0 0
    %136 = vmatpush1.bf16.msra.mxu0 0
    %137 = vmatprep.subr.bf16.mxu0 0
    %138 = vmatpush1.bf16.msra.mxu0 0
    %139 = vmatprep.subr.bf16.mxu0 0
    %140 = vmatpush1.bf16.msra.mxu0 0
    %141 = vmatprep.subr.bf16.mxu0 0
    %142 = vmatpush1.bf16.msra.mxu0 0
    %143 = vmatprep.subr.bf16.mxu0 0
    %144 = vmatpush1.bf16.msra.mxu0 0
    %145 = vmatprep.subr.bf16.mxu0 0
    %146 = vmatpush1.bf16.msra.mxu0 0
    %147 = vmatprep.subr.bf16.mxu0 0
    %148 = vmatpush1.bf16.msra.mxu0 0
    %149 = vmatprep.subr.bf16.mxu0 0
    %150 = vmatpush1.bf16.msra.mxu0 0
    %151 = vmatprep.subr.bf16.mxu0 0
    %152 = vmatpush1.bf16.msra.mxu0 0
    %153 = vmatprep.subr.bf16.mxu0 0
    %154 = vmatpush1.bf16.msra.mxu0 0
    %155 = vmatprep.subr.bf16.mxu0 0
    %156 = vmatpush1.bf16.msra.mxu0 0
    %157 = vmatprep.mubr.bf16.mxu0 0
    %158 = vmatmul.mubr.bf16.gmra.mrb[0].mxu0 %v123
    %v159 = vpop.f32.mrb[0].mxu0
    %v160 = vadd.f32 0.0, %v159
    %v161 = vpop.f32.mrb[0].mxu0
    %v162 = vpop.f32.mrb[0].mxu0
    %v163 = vadd.f32 0.0, %v162
    %v164 = vpop.f32.mrb[0].mxu0
    %165 = vdwg.mxu0
    %v166 = vadd.f32 %v98, %v160
    %v167 = vadd.f32 %v99, %v163
    %168 = vst.msk [vmem:[#allocation2] sm:$0xff] %vm121, %v166
    %169 = vst.msk [vmem:[#allocation2 + $0x8] sm:$0xff] %vm121, %v167
    %v170 = vld [vmem:[#allocation2] sm:$0xff]
    %v171 = vld [vmem:[#allocation2 + $0x8] sm:$0xff]
    %s172 = scalar_lea.vmem [#allocation11], 48
    %v173 = vld [vmem:[%s172] sm:$0xf]
    %v174 = vld [vmem:[%s172 + $0x4] sm:$0xf]
    %v175 = vld [vmem:[%s172 + $0x8] sm:$0xf]
    %v176 = vld [vmem:[%s172 + $0xc] sm:$0xf]
    %v179 = vunpack.c.l.b16 %v94
    %v180 = vunpack.c.l.b16 %v95
    %v181 = vpack.c.b16 %v180, %v179
    %v186 = vunpack.c.l.b16 %v173
    %v187 = vunpack.c.l.b16 %v174
    %v188 = vunpack.c.l.b16 %v175
    %v189 = vunpack.c.l.b16 %v176
    %v190 = vpack.c.b16 %v187, %v186
    %v191 = vpack.c.b16 %v189, %v188
    %v195 = vsel %vm121, %v181, 0
    %197 = vmatprep.subr.bf16.mxu0 0
    %198 = vmatpush1.bf16.msra.mxu0 %v190
    %199 = vmatprep.subr.bf16.mxu0 0
    %200 = vmatpush1.bf16.msra.mxu0 %v191
    %201 = vmatprep.subr.bf16.mxu0 0
    %202 = vmatpush1.bf16.msra.mxu0 0
    %203 = vmatprep.subr.bf16.mxu0 0
    %204 = vmatpush1.bf16.msra.mxu0 0
    %205 = vmatprep.subr.bf16.mxu0 0
    %206 = vmatpush1.bf16.msra.mxu0 0
    %207 = vmatprep.subr.bf16.mxu0 0
    %208 = vmatpush1.bf16.msra.mxu0 0
    %209 = vmatprep.subr.bf16.mxu0 0
    %210 = vmatpush1.bf16.msra.mxu0 0
    %211 = vmatprep.subr.bf16.mxu0 0
    %212 = vmatpush1.bf16.msra.mxu0 0
    %213 = vmatprep.subr.bf16.mxu0 0
    %214 = vmatpush1.bf16.msra.mxu0 0
    %215 = vmatprep.subr.bf16.mxu0 0
    %216 = vmatpush1.bf16.msra.mxu0 0
    %217 = vmatprep.subr.bf16.mxu0 0
    %218 = vmatpush1.bf16.msra.mxu0 0
    %219 = vmatprep.subr.bf16.mxu0 0
    %220 = vmatpush1.bf16.msra.mxu0 0
    %221 = vmatprep.subr.bf16.mxu0 0
    %222 = vmatpush1.bf16.msra.mxu0 0
    %223 = vmatprep.subr.bf16.mxu0 0
    %224 = vmatpush1.bf16.msra.mxu0 0
    %225 = vmatprep.subr.bf16.mxu0 0
    %226 = vmatpush1.bf16.msra.mxu0 0
    %227 = vmatprep.subr.bf16.mxu0 0
    %228 = vmatpush1.bf16.msra.mxu0 0
    %229 = vmatprep.mubr.bf16.mxu0 0
    %230 = vmatmul.mubr.bf16.gmra.mrb[0].mxu0 %v195
    %v231 = vpop.f32.mrb[0].mxu0
    %v232 = vadd.f32 0.0, %v231
    %v233 = vpop.f32.mrb[0].mxu0
    %v234 = vpop.f32.mrb[0].mxu0
    %v235 = vadd.f32 0.0, %v234
    %v236 = vpop.f32.mrb[0].mxu0
    %237 = vdwg.mxu0
    %v238 = vadd.f32 %v170, %v232
    %v239 = vadd.f32 %v171, %v235
    %240 = vst.msk [vmem:[#allocation2] sm:$0xff] %vm121, %v238
    %241 = vst.msk [vmem:[#allocation2 + $0x8] sm:$0xff] %vm121, %v239
    %v242 = vld [vmem:[#allocation2] sm:$0xff]
    %v243 = vld [vmem:[#allocation2 + $0x8] sm:$0xff]
    %s244 = scalar_lea.vmem [#allocation11], 96
    %v245 = vld [vmem:[%s244] sm:$0xf]
    %v246 = vld [vmem:[%s244 + $0x4] sm:$0xf]
    %v247 = vld [vmem:[%s244 + $0x8] sm:$0xf]
    %v248 = vld [vmem:[%s244 + $0xc] sm:$0xf]
    %v251 = vunpack.c.l.b16 %v96
    %v252 = vunpack.c.l.b16 %v97
    %v253 = vpack.c.b16 %v252, %v251
    %v258 = vunpack.c.l.b16 %v245
    %v259 = vunpack.c.l.b16 %v246
    %v260 = vunpack.c.l.b16 %v247
    %v261 = vunpack.c.l.b16 %v248
    %v262 = vpack.c.b16 %v259, %v258
    %v263 = vpack.c.b16 %v261, %v260
    %v267 = vsel %vm121, %v253, 0
    %269 = vmatprep.subr.bf16.mxu0 0
    %270 = vmatpush1.bf16.msra.mxu0 %v262
    %271 = vmatprep.subr.bf16.mxu0 0
    %272 = vmatpush1.bf16.msra.mxu0 %v263
    %273 = vmatprep.subr.bf16.mxu0 0
    %274 = vmatpush1.bf16.msra.mxu0 0
    %275 = vmatprep.subr.bf16.mxu0 0
    %276 = vmatpush1.bf16.msra.mxu0 0
    %277 = vmatprep.subr.bf16.mxu0 0
    %278 = vmatpush1.bf16.msra.mxu0 0
    %279 = vmatprep.subr.bf16.mxu0 0
    %280 = vmatpush1.bf16.msra.mxu0 0
    %281 = vmatprep.subr.bf16.mxu0 0
    %282 = vmatpush1.bf16.msra.mxu0 0
    %283 = vmatprep.subr.bf16.mxu0 0
    %284 = vmatpush1.bf16.msra.mxu0 0
    %285 = vmatprep.subr.bf16.mxu0 0
    %286 = vmatpush1.bf16.msra.mxu0 0
    %287 = vmatprep.subr.bf16.mxu0 0
    %288 = vmatpush1.bf16.msra.mxu0 0
    %289 = vmatprep.subr.bf16.mxu0 0
    %290 = vmatpush1.bf16.msra.mxu0 0
    %291 = vmatprep.subr.bf16.mxu0 0
    %292 = vmatpush1.bf16.msra.mxu0 0
    %293 = vmatprep.subr.bf16.mxu0 0
    %294 = vmatpush1.bf16.msra.mxu0 0
    %295 = vmatprep.subr.bf16.mxu0 0
    %296 = vmatpush1.bf16.msra.mxu0 0
    %297 = vmatprep.subr.bf16.mxu0 0
    %298 = vmatpush1.bf16.msra.mxu0 0
    %299 = vmatprep.subr.bf16.mxu0 0
    %300 = vmatpush1.bf16.msra.mxu0 0
    %301 = vmatprep.mubr.bf16.mxu0 0
    %302 = vmatmul.mubr.bf16.gmra.mrb[0].mxu0 %v267
    %v303 = vpop.f32.mrb[0].mxu0
    %v304 = vadd.f32 0.0, %v303
    %v305 = vpop.f32.mrb[0].mxu0
    %v306 = vpop.f32.mrb[0].mxu0
    %v307 = vadd.f32 0.0, %v306
    %v308 = vpop.f32.mrb[0].mxu0
    %309 = vdwg.mxu0
    %v310 = vadd.f32 %v242, %v304
    %v311 = vadd.f32 %v243, %v307
    %312 = vst.msk [vmem:[#allocation2] sm:$0xff] %vm121, %v310
    %313 = vst.msk [vmem:[#allocation2 + $0x8] sm:$0xff] %vm121, %v311
    %v314 = vld [vmem:[#allocation3] sm:$0xff]
    %v315 = vld [vmem:[#allocation3 + $0x8] sm:$0xff]
    %s316 = scalar_lea.vmem [#allocation11], 16
    %v317 = vld [vmem:[%s316] sm:$0xf]
    %v318 = vld [vmem:[%s316 + $0x4] sm:$0xf]
    %v319 = vld [vmem:[%s316 + $0x8] sm:$0xf]
    %v320 = vld [vmem:[%s316 + $0xc] sm:$0xf]
    %v325 = vunpack.c.l.b16 %v317
    %v326 = vunpack.c.l.b16 %v318
    %v327 = vunpack.c.l.b16 %v319
    %v328 = vunpack.c.l.b16 %v320
    %v329 = vpack.c.b16 %v326, %v325
    %v330 = vpack.c.b16 %v328, %v327
    %333 = vmatprep.subr.bf16.mxu0 0
    %334 = vmatpush1.bf16.msra.mxu0 %v329
    %335 = vmatprep.subr.bf16.mxu0 0
    %336 = vmatpush1.bf16.msra.mxu0 %v330
    %337 = vmatprep.subr.bf16.mxu0 0
    %338 = vmatpush1.bf16.msra.mxu0 0
    %339 = vmatprep.subr.bf16.mxu0 0
    %340 = vmatpush1.bf16.msra.mxu0 0
    %341 = vmatprep.subr.bf16.mxu0 0
    %342 = vmatpush1.bf16.msra.mxu0 0
    %343 = vmatprep.subr.bf16.mxu0 0
    %344 = vmatpush1.bf16.msra.mxu0 0
    %345 = vmatprep.subr.bf16.mxu0 0
    %346 = vmatpush1.bf16.msra.mxu0 0
    %347 = vmatprep.subr.bf16.mxu0 0
    %348 = vmatpush1.bf16.msra.mxu0 0
    %349 = vmatprep.subr.bf16.mxu0 0
    %350 = vmatpush1.bf16.msra.mxu0 0
    %351 = vmatprep.subr.bf16.mxu0 0
    %352 = vmatpush1.bf16.msra.mxu0 0
    %353 = vmatprep.subr.bf16.mxu0 0
    %354 = vmatpush1.bf16.msra.mxu0 0
    %355 = vmatprep.subr.bf16.mxu0 0
    %356 = vmatpush1.bf16.msra.mxu0 0
    %357 = vmatprep.subr.bf16.mxu0 0
    %358 = vmatpush1.bf16.msra.mxu0 0
    %359 = vmatprep.subr.bf16.mxu0 0
    %360 = vmatpush1.bf16.msra.mxu0 0
    %361 = vmatprep.subr.bf16.mxu0 0
    %362 = vmatpush1.bf16.msra.mxu0 0
    %363 = vmatprep.subr.bf16.mxu0 0
    %364 = vmatpush1.bf16.msra.mxu0 0
    %365 = vmatprep.mubr.bf16.mxu0 0
    %366 = vmatmul.mubr.bf16.gmra.mrb[0].mxu0 %v123
    %v367 = vpop.f32.mrb[0].mxu0
    %v368 = vadd.f32 0.0, %v367
    %v369 = vpop.f32.mrb[0].mxu0
    %v370 = vpop.f32.mrb[0].mxu0
    %v371 = vadd.f32 0.0, %v370
    %v372 = vpop.f32.mrb[0].mxu0
    %373 = vdwg.mxu0
    %v374 = vadd.f32 %v314, %v368
    %v375 = vadd.f32 %v315, %v371
    %376 = vst.msk [vmem:[#allocation3] sm:$0xff] %vm121, %v374
    %377 = vst.msk [vmem:[#allocation3 + $0x8] sm:$0xff] %vm121, %v375
    %v378 = vld [vmem:[#allocation3] sm:$0xff]
    %v379 = vld [vmem:[#allocation3 + $0x8] sm:$0xff]
    %s380 = scalar_lea.vmem [#allocation11], 64
    %v381 = vld [vmem:[%s380] sm:$0xf]
    %v382 = vld [vmem:[%s380 + $0x4] sm:$0xf]
    %v383 = vld [vmem:[%s380 + $0x8] sm:$0xf]
    %v384 = vld [vmem:[%s380 + $0xc] sm:$0xf]
    %v389 = vunpack.c.l.b16 %v381
    %v390 = vunpack.c.l.b16 %v382
    %v391 = vunpack.c.l.b16 %v383
    %v392 = vunpack.c.l.b16 %v384
    %v393 = vpack.c.b16 %v390, %v389
    %v394 = vpack.c.b16 %v392, %v391
    %397 = vmatprep.subr.bf16.mxu0 0
    %398 = vmatpush1.bf16.msra.mxu0 %v393
    %399 = vmatprep.subr.bf16.mxu0 0
    %400 = vmatpush1.bf16.msra.mxu0 %v394
    %401 = vmatprep.subr.bf16.mxu0 0
    %402 = vmatpush1.bf16.msra.mxu0 0
    %403 = vmatprep.subr.bf16.mxu0 0
    %404 = vmatpush1.bf16.msra.mxu0 0
    %405 = vmatprep.subr.bf16.mxu0 0
    %406 = vmatpush1.bf16.msra.mxu0 0
    %407 = vmatprep.subr.bf16.mxu0 0
    %408 = vmatpush1.bf16.msra.mxu0 0
    %409 = vmatprep.subr.bf16.mxu0 0
    %410 = vmatpush1.bf16.msra.mxu0 0
    %411 = vmatprep.subr.bf16.mxu0 0
    %412 = vmatpush1.bf16.msra.mxu0 0
    %413 = vmatprep.subr.bf16.mxu0 0
    %414 = vmatpush1.bf16.msra.mxu0 0
    %415 = vmatprep.subr.bf16.mxu0 0
    %416 = vmatpush1.bf16.msra.mxu0 0
    %417 = vmatprep.subr.bf16.mxu0 0
    %418 = vmatpush1.bf16.msra.mxu0 0
    %419 = vmatprep.subr.bf16.mxu0 0
    %420 = vmatpush1.bf16.msra.mxu0 0
    %421 = vmatprep.subr.bf16.mxu0 0
    %422 = vmatpush1.bf16.msra.mxu0 0
    %423 = vmatprep.subr.bf16.mxu0 0
    %424 = vmatpush1.bf16.msra.mxu0 0
    %425 = vmatprep.subr.bf16.mxu0 0
    %426 = vmatpush1.bf16.msra.mxu0 0
    %427 = vmatprep.subr.bf16.mxu0 0
    %428 = vmatpush1.bf16.msra.mxu0 0
    %429 = vmatprep.mubr.bf16.mxu0 0
    %430 = vmatmul.mubr.bf16.gmra.mrb[0].mxu0 %v195
    %v431 = vpop.f32.mrb[0].mxu0
    %v432 = vadd.f32 0.0, %v431
    %v433 = vpop.f32.mrb[0].mxu0
    %v434 = vpop.f32.mrb[0].mxu0
    %v435 = vadd.f32 0.0, %v434
    %v436 = vpop.f32.mrb[0].mxu0
    %437 = vdwg.mxu0
    %v438 = vadd.f32 %v378, %v432
    %v439 = vadd.f32 %v379, %v435
    %440 = vst.msk [vmem:[#allocation3] sm:$0xff] %vm121, %v438
    %441 = vst.msk [vmem:[#allocation3 + $0x8] sm:$0xff] %vm121, %v439
    %v442 = vld [vmem:[#allocation3] sm:$0xff]
    %v443 = vld [vmem:[#allocation3 + $0x8] sm:$0xff]
    %s444 = scalar_lea.vmem [#allocation11], 112
    %v445 = vld [vmem:[%s444] sm:$0xf]
    %v446 = vld [vmem:[%s444 + $0x4] sm:$0xf]
    %v447 = vld [vmem:[%s444 + $0x8] sm:$0xf]
    %v448 = vld [vmem:[%s444 + $0xc] sm:$0xf]
    %v453 = vunpack.c.l.b16 %v445
    %v454 = vunpack.c.l.b16 %v446
    %v455 = vunpack.c.l.b16 %v447
    %v456 = vunpack.c.l.b16 %v448
    %v457 = vpack.c.b16 %v454, %v453
    %v458 = vpack.c.b16 %v456, %v455
    %461 = vmatprep.subr.bf16.mxu0 0
    %462 = vmatpush1.bf16.msra.mxu0 %v457
    %463 = vmatprep.subr.bf16.mxu0 0
    %464 = vmatpush1.bf16.msra.mxu0 %v458
    %465 = vmatprep.subr.bf16.mxu0 0
    %466 = vmatpush1.bf16.msra.mxu0 0
    %467 = vmatprep.subr.bf16.mxu0 0
    %468 = vmatpush1.bf16.msra.mxu0 0
    %469 = vmatprep.subr.bf16.mxu0 0
    %470 = vmatpush1.bf16.msra.mxu0 0
    %471 = vmatprep.subr.bf16.mxu0 0
    %472 = vmatpush1.bf16.msra.mxu0 0
    %473 = vmatprep.subr.bf16.mxu0 0
    %474 = vmatpush1.bf16.msra.mxu0 0
    %475 = vmatprep.subr.bf16.mxu0 0
    %476 = vmatpush1.bf16.msra.mxu0 0
    %477 = vmatprep.subr.bf16.mxu0 0
    %478 = vmatpush1.bf16.msra.mxu0 0
    %479 = vmatprep.subr.bf16.mxu0 0
    %480 = vmatpush1.bf16.msra.mxu0 0
    %481 = vmatprep.subr.bf16.mxu0 0
    %482 = vmatpush1.bf16.msra.mxu0 0
    %483 = vmatprep.subr.bf16.mxu0 0
    %484 = vmatpush1.bf16.msra.mxu0 0
    %485 = vmatprep.subr.bf16.mxu0 0
    %486 = vmatpush1.bf16.msra.mxu0 0
    %487 = vmatprep.subr.bf16.mxu0 0
    %488 = vmatpush1.bf16.msra.mxu0 0
    %489 = vmatprep.subr.bf16.mxu0 0
    %490 = vmatpush1.bf16.msra.mxu0 0
    %491 = vmatprep.subr.bf16.mxu0 0
    %492 = vmatpush1.bf16.msra.mxu0 0
    %493 = vmatprep.mubr.bf16.mxu0 0
    %494 = vmatmul.mubr.bf16.gmra.mrb[0].mxu0 %v267
    %v495 = vpop.f32.mrb[0].mxu0
    %v496 = vadd.f32 0.0, %v495
    %v497 = vpop.f32.mrb[0].mxu0
    %v498 = vpop.f32.mrb[0].mxu0
    %v499 = vadd.f32 0.0, %v498
    %v500 = vpop.f32.mrb[0].mxu0
    %501 = vdwg.mxu0
    %v502 = vadd.f32 %v442, %v496
    %v503 = vadd.f32 %v443, %v499
    %504 = vst.msk [vmem:[#allocation3] sm:$0xff] %vm121, %v502
    %505 = vst.msk [vmem:[#allocation3 + $0x8] sm:$0xff] %vm121, %v503
    %v506 = vld [vmem:[#allocation4] sm:$0xff]
    %v507 = vld [vmem:[#allocation4 + $0x8] sm:$0xff]
    %s508 = scalar_lea.vmem [#allocation11], 32
    %v509 = vld [vmem:[%s508] sm:$0xf]
    %v510 = vld [vmem:[%s508 + $0x4] sm:$0xf]
    %v511 = vld [vmem:[%s508 + $0x8] sm:$0xf]
    %v512 = vld [vmem:[%s508 + $0xc] sm:$0xf]
    %v517 = vunpack.c.l.b16 %v509
    %v518 = vunpack.c.l.b16 %v510
    %v519 = vunpack.c.l.b16 %v511
    %v520 = vunpack.c.l.b16 %v512
    %v521 = vpack.c.b16 %v518, %v517
    %v522 = vpack.c.b16 %v520, %v519
    %525 = vmatprep.subr.bf16.mxu0 0
    %526 = vmatpush1.bf16.msra.mxu0 %v521
    %527 = vmatprep.subr.bf16.mxu0 0
    %528 = vmatpush1.bf16.msra.mxu0 %v522
    %529 = vmatprep.subr.bf16.mxu0 0
    %530 = vmatpush1.bf16.msra.mxu0 0
    %531 = vmatprep.subr.bf16.mxu0 0
    %532 = vmatpush1.bf16.msra.mxu0 0
    %533 = vmatprep.subr.bf16.mxu0 0
    %534 = vmatpush1.bf16.msra.mxu0 0
    %535 = vmatprep.subr.bf16.mxu0 0
    %536 = vmatpush1.bf16.msra.mxu0 0
    %537 = vmatprep.subr.bf16.mxu0 0
    %538 = vmatpush1.bf16.msra.mxu0 0
    %539 = vmatprep.subr.bf16.mxu0 0
    %540 = vmatpush1.bf16.msra.mxu0 0
    %541 = vmatprep.subr.bf16.mxu0 0
    %542 = vmatpush1.bf16.msra.mxu0 0
    %543 = vmatprep.subr.bf16.mxu0 0
    %544 = vmatpush1.bf16.msra.mxu0 0
    %545 = vmatprep.subr.bf16.mxu0 0
    %546 = vmatpush1.bf16.msra.mxu0 0
    %547 = vmatprep.subr.bf16.mxu0 0
    %548 = vmatpush1.bf16.msra.mxu0 0
    %549 = vmatprep.subr.bf16.mxu0 0
    %550 = vmatpush1.bf16.msra.mxu0 0
    %551 = vmatprep.subr.bf16.mxu0 0
    %552 = vmatpush1.bf16.msra.mxu0 0
    %553 = vmatprep.subr.bf16.mxu0 0
    %554 = vmatpush1.bf16.msra.mxu0 0
    %555 = vmatprep.subr.bf16.mxu0 0
    %556 = vmatpush1.bf16.msra.mxu0 0
    %557 = vmatprep.mubr.bf16.mxu0 0
    %558 = vmatmul.mubr.bf16.gmra.mrb[0].mxu0 %v123
    %v559 = vpop.f32.mrb[0].mxu0
    %v560 = vadd.f32 0.0, %v559
    %v561 = vpop.f32.mrb[0].mxu0
    %v562 = vpop.f32.mrb[0].mxu0
    %v563 = vadd.f32 0.0, %v562
    %v564 = vpop.f32.mrb[0].mxu0
    %565 = vdwg.mxu0
    %v566 = vadd.f32 %v506, %v560
    %v567 = vadd.f32 %v507, %v563
    %568 = vst.msk [vmem:[#allocation4] sm:$0xff] %vm121, %v566
    %569 = vst.msk [vmem:[#allocation4 + $0x8] sm:$0xff] %vm121, %v567
    %v570 = vld [vmem:[#allocation4] sm:$0xff]
    %v571 = vld [vmem:[#allocation4 + $0x8] sm:$0xff]
    %s572 = scalar_lea.vmem [#allocation11], 80
    %v573 = vld [vmem:[%s572] sm:$0xf]
    %v574 = vld [vmem:[%s572 + $0x4] sm:$0xf]
    %v575 = vld [vmem:[%s572 + $0x8] sm:$0xf]
    %v576 = vld [vmem:[%s572 + $0xc] sm:$0xf]
    %v581 = vunpack.c.l.b16 %v573
    %v582 = vunpack.c.l.b16 %v574
    %v583 = vunpack.c.l.b16 %v575
    %v584 = vunpack.c.l.b16 %v576
    %v585 = vpack.c.b16 %v582, %v581
    %v586 = vpack.c.b16 %v584, %v583
    %589 = vmatprep.subr.bf16.mxu0 0
    %590 = vmatpush1.bf16.msra.mxu0 %v585
    %591 = vmatprep.subr.bf16.mxu0 0
    %592 = vmatpush1.bf16.msra.mxu0 %v586
    %593 = vmatprep.subr.bf16.mxu0 0
    %594 = vmatpush1.bf16.msra.mxu0 0
    %595 = vmatprep.subr.bf16.mxu0 0
    %596 = vmatpush1.bf16.msra.mxu0 0
    %597 = vmatprep.subr.bf16.mxu0 0
    %598 = vmatpush1.bf16.msra.mxu0 0
    %599 = vmatprep.subr.bf16.mxu0 0
    %600 = vmatpush1.bf16.msra.mxu0 0
    %601 = vmatprep.subr.bf16.mxu0 0
    %602 = vmatpush1.bf16.msra.mxu0 0
    %603 = vmatprep.subr.bf16.mxu0 0
    %604 = vmatpush1.bf16.msra.mxu0 0
    %605 = vmatprep.subr.bf16.mxu0 0
    %606 = vmatpush1.bf16.msra.mxu0 0
    %607 = vmatprep.subr.bf16.mxu0 0
    %608 = vmatpush1.bf16.msra.mxu0 0
    %609 = vmatprep.subr.bf16.mxu0 0
    %610 = vmatpush1.bf16.msra.mxu0 0
    %611 = vmatprep.subr.bf16.mxu0 0
    %612 = vmatpush1.bf16.msra.mxu0 0
    %613 = vmatprep.subr.bf16.mxu0 0
    %614 = vmatpush1.bf16.msra.mxu0 0
    %615 = vmatprep.subr.bf16.mxu0 0
    %616 = vmatpush1.bf16.msra.mxu0 0
    %617 = vmatprep.subr.bf16.mxu0 0
    %618 = vmatpush1.bf16.msra.mxu0 0
    %619 = vmatprep.subr.bf16.mxu0 0
    %620 = vmatpush1.bf16.msra.mxu0 0
    %621 = vmatprep.mubr.bf16.mxu0 0
    %622 = vmatmul.mubr.bf16.gmra.mrb[0].mxu0 %v195
    %v623 = vpop.f32.mrb[0].mxu0
    %v624 = vadd.f32 0.0, %v623
    %v625 = vpop.f32.mrb[0].mxu0
    %v626 = vpop.f32.mrb[0].mxu0
    %v627 = vadd.f32 0.0, %v626
    %v628 = vpop.f32.mrb[0].mxu0
    %629 = vdwg.mxu0
    %v630 = vadd.f32 %v570, %v624
    %v631 = vadd.f32 %v571, %v627
    %632 = vst.msk [vmem:[#allocation4] sm:$0xff] %vm121, %v630
    %633 = vst.msk [vmem:[#allocation4 + $0x8] sm:$0xff] %vm121, %v631
    %v634 = vld [vmem:[#allocation4] sm:$0xff]
    %v635 = vld [vmem:[#allocation4 + $0x8] sm:$0xff]
    %s636 = scalar_lea.vmem [#allocation11], 128
    %v637 = vld [vmem:[%s636] sm:$0xf]
    %v638 = vld [vmem:[%s636 + $0x4] sm:$0xf]
    %v639 = vld [vmem:[%s636 + $0x8] sm:$0xf]
    %v640 = vld [vmem:[%s636 + $0xc] sm:$0xf]
    %v645 = vunpack.c.l.b16 %v637
    %v646 = vunpack.c.l.b16 %v638
    %v647 = vunpack.c.l.b16 %v639
    %v648 = vunpack.c.l.b16 %v640
    %v649 = vpack.c.b16 %v646, %v645
    %v650 = vpack.c.b16 %v648, %v647
    %653 = vmatprep.subr.bf16.mxu0 0
    %654 = vmatpush1.bf16.msra.mxu0 %v649
    %655 = vmatprep.subr.bf16.mxu0 0
    %656 = vmatpush1.bf16.msra.mxu0 %v650
    %657 = vmatprep.subr.bf16.mxu0 0
    %658 = vmatpush1.bf16.msra.mxu0 0
    %659 = vmatprep.subr.bf16.mxu0 0
    %660 = vmatpush1.bf16.msra.mxu0 0
    %661 = vmatprep.subr.bf16.mxu0 0
    %662 = vmatpush1.bf16.msra.mxu0 0
    %663 = vmatprep.subr.bf16.mxu0 0
    %664 = vmatpush1.bf16.msra.mxu0 0
    %665 = vmatprep.subr.bf16.mxu0 0
    %666 = vmatpush1.bf16.msra.mxu0 0
    %667 = vmatprep.subr.bf16.mxu0 0
    %668 = vmatpush1.bf16.msra.mxu0 0
    %669 = vmatprep.subr.bf16.mxu0 0
    %670 = vmatpush1.bf16.msra.mxu0 0
    %671 = vmatprep.subr.bf16.mxu0 0
    %672 = vmatpush1.bf16.msra.mxu0 0
    %673 = vmatprep.subr.bf16.mxu0 0
    %674 = vmatpush1.bf16.msra.mxu0 0
    %675 = vmatprep.subr.bf16.mxu0 0
    %676 = vmatpush1.bf16.msra.mxu0 0
    %677 = vmatprep.subr.bf16.mxu0 0
    %678 = vmatpush1.bf16.msra.mxu0 0
    %679 = vmatprep.subr.bf16.mxu0 0
    %680 = vmatpush1.bf16.msra.mxu0 0
    %681 = vmatprep.subr.bf16.mxu0 0
    %682 = vmatpush1.bf16.msra.mxu0 0
    %683 = vmatprep.subr.bf16.mxu0 0
    %684 = vmatpush1.bf16.msra.mxu0 0
    %685 = vmatprep.mubr.bf16.mxu0 0
    %686 = vmatmul.mubr.bf16.gmra.mrb[0].mxu0 %v267
    %v687 = vpop.f32.mrb[0].mxu0
    %v688 = vadd.f32 0.0, %v687
    %v689 = vpop.f32.mrb[0].mxu0
    %v690 = vpop.f32.mrb[0].mxu0
    %v691 = vadd.f32 0.0, %v690
    %v692 = vpop.f32.mrb[0].mxu0
    %693 = vdwg.mxu0
    %v694 = vadd.f32 %v634, %v688
    %v695 = vadd.f32 %v635, %v691
    %696 = vst.msk [vmem:[#allocation4] sm:$0xff] %vm121, %v694
    %697 = vst.msk [vmem:[#allocation4 + $0x8] sm:$0xff] %vm121, %v695
    // Predicated region
    $region42: #{tpu_custom_call.1} parent=1 // pred_check
      %p698 = pneg %p81
    $region43: #{tpu_custom_call.1} parent=1 // pred_check_branch
      %700 = sbr.rel (%p698) target = $region45
    $region44: #{tpu_custom_call.1} parent=1 // pred_region
      %v701 = vld [vmem:[#allocation2] sm:$0xff]
      %v702 = vld [vmem:[#allocation2 + $0x8] sm:$0xff]
      %v703 = vld [vmem:[%s4] sm:$0x1]
      %v705 = vlaneseq
      %v706 = vshrl.u32 %v705, 7
      %v707 = vsub.s32 0, %v706
      %v708 = vrot.slane %v703, %v707
      %v710 = vadd.f32 %v701, %v708
      %v711 = vadd.f32 %v702, %v708
      %v712 = vpack.c.bf16 %v711, %v710
      %v714 = vunpack.c.l.b16 %v712
      %v715 = vunpack.c.h.b16 %v712
      %v716 = vpack.c.b16 %v714, %v714
      %v717 = vpack.c.b16 %v715, %v715
      %vm720 = vcmask 257024
      %721 = vst.msk [vmem:[#allocation13] sm:$0xf] %vm720, %v716
      %722 = vst.msk [vmem:[#allocation13 + $0x4] sm:$0xf] %vm720, %v717
      %v723 = vld [vmem:[#allocation3] sm:$0xff]
      %v724 = vld [vmem:[#allocation3 + $0x8] sm:$0xff]
      %s725 = scalar_lea.vmem %s4, 1
      %v726 = vld [vmem:[%s725] sm:$0x1]
      %v728 = vlaneseq
      %v729 = vshrl.u32 %v728, 7
      %v730 = vsub.s32 0, %v729
      %v731 = vrot.slane %v726, %v730
      %v733 = vadd.f32 %v723, %v731
      %v734 = vadd.f32 %v724, %v731
      %v735 = vpack.c.bf16 %v734, %v733
      %v737 = vunpack.c.l.b16 %v735
      %v738 = vunpack.c.h.b16 %v735
      %v739 = vpack.c.b16 %v737, %v737
      %v740 = vpack.c.b16 %v738, %v738
      %743 = vst.msk [vmem:[#allocation14] sm:$0xf] %vm720, %v739
      %744 = vst.msk [vmem:[#allocation14 + $0x4] sm:$0xf] %vm720, %v740
      %v745 = vld [vmem:[#allocation4] sm:$0xff]
      %v746 = vld [vmem:[#allocation4 + $0x8] sm:$0xff]
      %s747 = scalar_lea.vmem %s4, 2
      %v748 = vld [vmem:[%s747] sm:$0x1]
      %v750 = vlaneseq
      %v751 = vshrl.u32 %v750, 7
      %v752 = vsub.s32 0, %v751
      %v753 = vrot.slane %v748, %v752
      %v755 = vadd.f32 %v745, %v753
      %v756 = vadd.f32 %v746, %v753
      %v757 = vpack.c.bf16 %v756, %v755
      %v759 = vunpack.c.l.b16 %v757
      %v760 = vunpack.c.h.b16 %v757
      %v761 = vpack.c.b16 %v759, %v759
      %v762 = vpack.c.b16 %v760, %v760
      %765 = vst.msk [vmem:[#allocation16] sm:$0xf] %vm720, %v761
      %766 = vst.msk [vmem:[#allocation16 + $0x4] sm:$0xf] %vm720, %v762
    $region45: #{tpu_custom_call.1} parent=1 // pred_fallthru
      _
    // Predicated region
    $region46: #{tpu_custom_call.1} parent=1 // pred_check
      _
    $region47: #{tpu_custom_call.1} parent=1 // pred_check_branch
      %768 = sbr.rel (0) target = $region49
    $region48: #{tpu_custom_call.1} parent=1 // pred_region
      %s770 = ssub.s32 128, 128
      %771 = vsyncadd [#allocation7], %s770
      %s772 = sshll.u32 [#allocation13], 4
      %s773 = int_to_ptr.vmem [resolvable:$true] %s772
      %778 = dma.vmem_to_hbm [thread:$0]  %s773, 128, %s5, [#allocation7], 64, 64, 4
    $region49: #{tpu_custom_call.1} parent=1 // pred_fallthru
      _
    // Predicated region
    $region50: #{tpu_custom_call.1} parent=1 // pred_check
      _
    $region51: #{tpu_custom_call.1} parent=1 // pred_check_branch
      %780 = sbr.rel (0) target = $region53
    $region52: #{tpu_custom_call.1} parent=1 // pred_region
      %s782 = ssub.s32 128, 128
      %783 = vsyncadd [#allocation15], %s782
      %s784 = sshll.u32 [#allocation14], 4
      %s785 = int_to_ptr.vmem [resolvable:$true] %s784
      %790 = dma.vmem_to_hbm [thread:$0]  %s785, 128, %s6, [#allocation15], 64, 64, 4
    $region53: #{tpu_custom_call.1} parent=1 // pred_fallthru
      _
    // Predicated region
    $region54: #{tpu_custom_call.1} parent=1 // pred_check
      _
    $region55: #{tpu_custom_call.1} parent=1 // pred_check_branch
      %792 = sbr.rel (0) target = $region57
    $region56: #{tpu_custom_call.1} parent=1 // pred_region
      %s794 = ssub.s32 128, 128
      %795 = vsyncadd [#allocation15], %s794
      %s796 = sshll.u32 [#allocation16], 4
      %s797 = int_to_ptr.vmem [resolvable:$true] %s796
      %802 = dma.vmem_to_hbm [thread:$0]  %s797, 128, %s7, [#allocation15], 64, 64, 4
    $region57: #{tpu_custom_call.1} parent=1 // pred_fallthru
      _
    // Predicated region
    $region58: #{tpu_custom_call.1} parent=1 // pred_check
      _
    $region59: #{tpu_custom_call.1} parent=1 // pred_check_branch
      %804 = sbr.rel (0) target = $region61
    $region60: #{tpu_custom_call.1} parent=1 // pred_region
      %805 = dma.done [#allocation7], 128
    $region61: #{tpu_custom_call.1} parent=1 // pred_fallthru
      _
    // Predicated region
    $region62: #{tpu_custom_call.1} parent=1 // pred_check
      _
    $region63: #{tpu_custom_call.1} parent=1 // pred_check_branch
      %807 = sbr.rel (0) target = $region65
    $region64: #{tpu_custom_call.1} parent=1 // pred_region
      %808 = dma.done [#allocation15], 128
    $region65: #{tpu_custom_call.1} parent=1 // pred_fallthru
      _
    // Predicated region
    $region66: #{tpu_custom_call.1} parent=1 // pred_check
      _
    $region67: #{tpu_custom_call.1} parent=1 // pred_check_branch
      %810 = sbr.rel (0) target = $region69
    $region68: #{tpu_custom_call.1} parent=1 // pred_region
      %811 = dma.done [#allocation15], 128
    $region69: #{tpu_custom_call.1} parent=1 // pred_fallthru
      _
    %812 = vsyncpa [#allocation6], 1
    %813 = vsyncpa [#allocation9], 1
    %814 = vsyncpa [#allocation12], 1
    %815 = vsyncpa [#allocation7], 1
    %816 = vsyncpa [#allocation15], 1

</llo_original>
